<compile_context>
chip_gen: v7x
topology: tpu7x:2x2x1
jax: 0.10.0
libtpu: 0.0.40
codegen_flags: <defaults>
</compile_context>

<pallas_src>
import jax
import jax.numpy as jnp
from jax.experimental import pallas as pl
from jax.experimental.pallas import tpu as pltpu


def _patchify_kernel(x_ref, o_ref):
    # x_ref: (1, C, P, W)        value  [0, c, kh, pw*P + kw] = x[b, c, ph*P + kh, pw*P + kw]
    # o_ref: (1, 1, Wp, C*P, P)  target [0, 0, pw, c*P + kh, kw]
    _, C, P, W = x_ref.shape
    Wp = W // P

    v = x_ref[0]                            # (C, P, W), lane-dense in W
    # Merge (c, kh) -> r.  Layout-preserving regroup (P is sublane-aligned).
    a = v.reshape(C * P, W)                 # (C*P, W)     a[r, pw*P + kw]
    # One dense 2-D transpose (XLU): puts (pw, kw) on sublanes, (c, kh) on lanes.
    at = a.T                                # (W, C*P)     at[pw*P + kw, r]
    # Split W (sublanes) into (pw, kw).  Layout-preserving regroup (P % 8 == 0).
    b3 = at.reshape(Wp, P, C * P)           # (Wp, P, C*P) b3[pw, kw, r]
    # Batched minor-two transpose (XLU) -> final (pw, r, kw) ordering; direct store.
    o_ref[0, 0] = jnp.swapaxes(b3, -1, -2)  # (Wp, C*P, P)


def picture_embedding(x, patch_size):
    """x: (B, C, H, W) -> (B, (H//P)*(W//P), C*P*P), matching PictureEmbedding.forward."""
    B, C, H, W = x.shape
    P = patch_size
    assert H % P == 0 and W % P == 0
    Hp, Wp = H // P, W // P
    D = C * P * P
    # TPU block-tiling rule: the block's second-minor dim (P) must be 8-aligned or
    # span all of H.  Holds for typical ViT configs (P = 8, 16, 32).
    assert P % 8 == 0 or Hp == 1, "TODO(synk): handle patch sizes not 8-aligned (e.g. P=14)"
    # Note: D is a multiple of 128 for the demo (256); for configs where it is not,
    # prefer fusing into the projection matmul rather than shipping padded stores.

    itemsize = jnp.dtype(x.dtype).itemsize
    out5 = pl.pallas_call(
        _patchify_kernel,
        out_shape=jax.ShapeDtypeStruct((B, Hp, Wp, C * P, P), x.dtype),
        grid_spec=pltpu.PrefetchScalarGridSpec(
            num_scalar_prefetch=0,
            grid=(B, Hp),
            in_specs=[
                # One strip of patch rows per step; W stays whole -> lane-dense DMA/loads.
                pl.BlockSpec((1, C, P, W), lambda b, ph: (b, 0, ph, 0)),
            ],
            out_specs=pl.BlockSpec(
                (1, 1, Wp, C * P, P), lambda b, ph: (b, ph, 0, 0, 0)
            ),
        ),
        compiler_params=pltpu.CompilerParams(
            # Every grid step writes a distinct output block -> both axes parallel
            # (keeps both v7x TensorCores busy even for small B).
            dimension_semantics=("parallel", "parallel"),
        ),
        cost_estimate=pl.CostEstimate(
            flops=0,
            transcendentals=0,
            bytes_accessed=2 * B * C * H * W * itemsize,
        ),
    )(x)

    # Contiguous (free) reshape: (B, Hp, Wp, C*P, P) -> (B, L, D); identical byte layout.
    return out5.reshape(B, Hp * Wp, D)


if __name__ == "__main__":
    # Small shapes consistent with the module: picture_size=(2, 4, 16, 16), patch_size=8.
    B, C, H, W = 2, 4, 16, 16
    P = 8
    key = jax.random.PRNGKey(0)
    x = jax.random.normal(key, (B, C, H, W), dtype=jnp.float32)

    out = picture_embedding(x, P)
    jax.block_until_ready(out)

    # Pure-JAX reference of F.unfold(kernel=stride=P) + permute(0, 2, 1).
    Hp, Wp = H // P, W // P
    ref = (
        x.reshape(B, C, Hp, P, Wp, P)
        .transpose(0, 2, 4, 1, 3, 5)
        .reshape(B, Hp * Wp, C * P * P)
    )

    assert out.shape == (B, Hp * Wp, C * P * P)
    assert jnp.array_equal(out, ref), "mismatch vs reference"
    print("KERNEL_OK")
</pallas_src>

<mosaic_0001>
module attributes {stable_mosaic.version = 11 : i64} {
  func.func @_patchify_kernel(%arg0: i32, %arg1: i32, %arg2: memref<1x4x8x16xf32, #tpu.memory_space<vmem>>, %arg3: memref<1x1x2x32x8xf32, #tpu.memory_space<vmem>>) attributes {dimension_semantics = [#tpu.dimension_semantics<parallel>, #tpu.dimension_semantics<parallel>], iteration_bounds = array<i64: 2, 2>, scalar_prefetch = 0 : i64, scratch_operands = 0 : i64, tpu.core_type = #tpu.core_type<tc>, window_params = [{transform_indices = @transform_0, window_bounds = array<i64: 1, 4, 8, 16>}, {transform_indices = @transform_1, window_bounds = array<i64: 1, 1, 2, 32, 8>}]} {
    %c0 = arith.constant 0 : index
    %c0_0 = arith.constant 0 : index
    %c0_1 = arith.constant 0 : index
    %c0_2 = arith.constant 0 : index
    %0 = vector.load %arg2[%c0, %c0_0, %c0_1, %c0_2] : memref<1x4x8x16xf32, #tpu.memory_space<vmem>>, vector<1x4x8x16xf32>
    %1 = vector.shape_cast %0 : vector<1x4x8x16xf32> to vector<4x8x16xf32>
    %2 = vector.shape_cast %1 : vector<4x8x16xf32> to vector<32x16xf32>
    %3 = tpu.transpose %2, [1, 0] : vector<32x16xf32> -> vector<16x32xf32>
    %4 = vector.shape_cast %3 : vector<16x32xf32> to vector<2x8x32xf32>
    %5 = tpu.transpose %4, [0, 2, 1] : vector<2x8x32xf32> -> vector<2x32x8xf32>
    %c0_3 = arith.constant 0 : index
    %c0_4 = arith.constant 0 : index
    %c0_5 = arith.constant 0 : index
    %c0_6 = arith.constant 0 : index
    %c0_7 = arith.constant 0 : index
    %6 = vector.load %arg3[%c0_3, %c0_4, %c0_5, %c0_6, %c0_7] : memref<1x1x2x32x8xf32, #tpu.memory_space<vmem>>, vector<1x1x2x32x8xf32>
    %7 = vector.shape_cast %6 : vector<1x1x2x32x8xf32> to vector<2x32x8xf32>
    %8 = vector.shape_cast %5 : vector<2x32x8xf32> to vector<1x1x2x32x8xf32>
    tpu.vector_store %arg3[%c0_3, %c0_4, %c0_5, %c0_6, %c0_7], %8 {strides = array<i32>} : memref<1x1x2x32x8xf32, #tpu.memory_space<vmem>>, vector<1x1x2x32x8xf32>,
    return
  }
  func.func @transform_0(%arg0: i32, %arg1: i32) -> (i32, i32, i32, i32) {
    %c0_i32 = arith.constant 0 : i32
    %c0_i32_0 = arith.constant 0 : i32
    %c0_i32_1 = arith.constant 0 : i32
    return %arg0, %c0_i32, %arg1, %c0_i32_0 : i32, i32, i32, i32
  }
  func.func @transform_1(%arg0: i32, %arg1: i32) -> (i32, i32, i32, i32, i32) {
    %c0_i32 = arith.constant 0 : i32
    %c0_i32_0 = arith.constant 0 : i32
    %c0_i32_1 = arith.constant 0 : i32
    %c0_i32_2 = arith.constant 0 : i32
    return %arg0, %arg1, %c0_i32, %c0_i32_0, %c0_i32_1 : i32, i32, i32, i32, i32
  }
}

</mosaic_0001>

<llo_original>
// kernel: tpu_custom_call.1
$region0: #{tpu_custom_call.1}
  #allocation0 [shape = 'u32[]', space=smem, size = 0x4, offset = 0x4, fixed_abs, tag = 'smem constant byte address 0x4 - core index']
  #allocation1 [shape = 'u32[144,128]{1,0:T(1,128)}', space=vmem, size = 0x12000, scoped, tag = 'internal scratch']
  %s0 = inlined_call_operand.hbm [shape: f32[2,4,16,16], index: 0, kind: input, shape index: {}]
  %s1 = inlined_call_operand.vmem [shape: f32[2,2,2,32,8], index: 1, kind: output, shape index: {}]
  %s2 = sld [smem:[#allocation0]]
  $region41: #{tpu_custom_call.1} parent=0
    _
  %s4 = ssub.s32 1, %s2
  %s5 = scalar_select 0, %s4, %s2
  $region1: #{tpu_custom_call.1} parent=0
    #allocation2 [shape = 'u8[32768]{0}', space=vmem, size = 0x8000, scoped, tag = 'input window, operand 0']
    #allocation3 [shape = 's32[2]{0}', space=sflag, size = 0x8, scoped, tag = 'scoped memory for tpu_custom_call.1']
    %6 = vsyncpa [#allocation3], 0
    %s7 = scalar_lea.sflag [#allocation3], 1
    %8 = vsyncpa %s7, 0
    loop: start=0, step=1, limit=6
    $region2: #{tpu_custom_call.1} parent=1 // loop_pre_header
      _
    $region3: #{tpu_custom_call.1} parent=1 // loop_header
      %s10 = sphi 0, %s14
      %p11 = scmp.ge.s32.totalorder %s10, 6
      %s17 = sphi 0, %s29
      %s18 = sphi 0, %s25
      %s19 = sphi 0, %s17
      %s20 = sphi 0, %s18
      %s21 = sphi 0, %s19
      %s22 = sphi 0, %s20
      %s34 = sphi 0, %s36
      %s37 = sphi 0, %s34
      %s38 = sphi 0, %s37
      %s54 = sphi 0, %s38
      %s62 = sphi 0, %s64
      %s65 = sphi 0, %s62
      %s66 = sphi 0, %s65
      %s82 = sphi 0, %s66
    $region4: #{tpu_custom_call.1} parent=1 // loop_header_branch
      %13 = sbr.rel (%p11) target = $region8
    $region5: #{tpu_custom_call.1} parent=1 // loop_body
      %s15 = ssub.s32 %s10, 1
      %s16 = ssub.s32 %s10, 2
      %s23 = sadd.s32 1, %s18
      %p24 = scmp.ge.s32.totalorder %s23, 2
      %s25 = scalar_select %p24, 0, %s23
      %s26 = sadd.s32 1, %s17
      %s27 = scalar_select %p24, %s26, %s17
      %p28 = scmp.ge.s32.totalorder %s27, 2
      %s29 = scalar_select %p28, 0, %s27
      %s30 = ssub.s32 %s17, %s29
      %s31 = ssub.s32 %s18, %s25
      %s32 = sor.u32 %s30, %s31
      %p33 = scmp.eq.s32.totalorder %s32, 0
      %s35 = sadd.s32 %s34, 1
      %s36 = scalar_select %p33, %s34, %s35
      %p39 = pneg %p33
      %p40 = scmp.eq.s32.totalorder %s10, 3
      %p41 = por %p39, %p40
      %p42 = scmp.ne.s32.totalorder %s34, %s37
      %p43 = scmp.eq.s32.totalorder %s10, 0
      %p44 = por %p42, %p43
      %p45 = scmp.ne.s32.totalorder %s34, %s37
      %p46 = scmp.eq.s32.totalorder %s15, 3
      %p47 = por %p45, %p46
      %p48 = scmp.ne.s32.totalorder %s37, %s38
      %p49 = scmp.eq.s32.totalorder %s15, 0
      %p50 = por %p48, %p49
      %p51 = scmp.ne.s32.totalorder %s37, %s38
      %p52 = scmp.eq.s32.totalorder %s16, 3
      %p53 = por %p51, %p52
      %p55 = scmp.ne.s32.totalorder %s38, %s54
      %p56 = scmp.eq.s32.totalorder %s16, 0
      %p57 = por %p55, %p56
      %s58 = ssub.s32 %s17, %s29
      %s59 = ssub.s32 %s18, %s25
      %s60 = sor.u32 %s58, %s59
      %p61 = scmp.eq.s32.totalorder %s60, 0
      %s63 = sadd.s32 %s62, 1
      %s64 = scalar_select %p61, %s62, %s63
      %p67 = pneg %p61
      %p68 = scmp.eq.s32.totalorder %s10, 3
      %p69 = por %p67, %p68
      %p70 = scmp.ne.s32.totalorder %s62, %s65
      %p71 = scmp.eq.s32.totalorder %s10, 0
      %p72 = por %p70, %p71
      %p73 = scmp.ne.s32.totalorder %s62, %s65
      %p74 = scmp.eq.s32.totalorder %s15, 3
      %p75 = por %p73, %p74
      %p76 = scmp.ne.s32.totalorder %s65, %s66
      %p77 = scmp.eq.s32.totalorder %s15, 0
      %p78 = por %p76, %p77
      %p79 = scmp.ne.s32.totalorder %s65, %s66
      %p80 = scmp.eq.s32.totalorder %s16, 3
      %p81 = por %p79, %p80
      %p83 = scmp.ne.s32.totalorder %s66, %s82
      %p84 = scmp.eq.s32.totalorder %s16, 0
      %p85 = por %p83, %p84
      %p86 = scmp.le.s32.totalorder 1, %s10
      %p87 = scmp.lt.s32.totalorder %s10, 5
      %p88 = pnand %p86, %p87
      %p89 = pneg %p88
      // Predicated region
      $region9: #{tpu_custom_call.1} parent=5 // pred_check
        _
      $region10: #{tpu_custom_call.1} parent=5 // pred_check_branch
        %91 = sbr.rel (%p88) target = $region12
      $region11: #{tpu_custom_call.1} parent=5 // pred_region
        %s92 = ssub.s32 %s10, 1
      $region12: #{tpu_custom_call.1} parent=5 // pred_fallthru
        _
      %p93 = scmp.lt.s32.totalorder %s10, 4
      // Predicated region
      $region13: #{tpu_custom_call.1} parent=5 // pred_check
        %p94 = pneg %p93
      $region14: #{tpu_custom_call.1} parent=5 // pred_check_branch
        %96 = sbr.rel (%p94) target = $region16
      $region15: #{tpu_custom_call.1} parent=5 // pred_region
        // Predicated region
        $region17: #{tpu_custom_call.1} parent=15 // pred_check
          %p97 = pneg %p44
        $region18: #{tpu_custom_call.1} parent=15 // pred_check_branch
          %99 = sbr.rel (%p97) target = $region20
        $region19: #{tpu_custom_call.1} parent=15 // pred_region
          %s100 = sand.u32 %s34, 1
          %s101 = scalar_lea.sflag [#allocation3], %s100
          %s102 = sand.u32 %s34, 1
          %s103 = smul.addr %s102, 32
          %s104 = scalar_lea.vmem [#allocation2], %s103
          %s106 = ssub.s32 512, 512
          %107 = vsyncadd %s101, %s106
          %s108 = smul.addr %s17, 8
          %s109 = sadd.s32 %s18, %s108
          %s110 = smul.addr %s109, 128
          %s111 = scalar_lea.hbm %s0, %s110
          %s112 = sshll.u32 %s104, 4
          %s113 = int_to_ptr.vmem [resolvable:$true] %s112
          %118 = dma.hbm_to_vmem [thread:$0]  %s111, 512, %s113, %s101, 256, 128, 8
        $region20: #{tpu_custom_call.1} parent=15 // pred_fallthru
          _
      $region16: #{tpu_custom_call.1} parent=5 // pred_fallthru
        _
      %p119 = scmp.le.s32.totalorder 1, %s10
      %p120 = scmp.lt.s32.totalorder %s10, 5
      %p121 = pnand %p119, %p120
      %p122 = pneg %p121
      // Predicated region
      $region21: #{tpu_custom_call.1} parent=5 // pred_check
        _
      $region22: #{tpu_custom_call.1} parent=5 // pred_check_branch
        %124 = sbr.rel (%p121) target = $region24
      $region23: #{tpu_custom_call.1} parent=5 // pred_region
        %s125 = ssub.s32 %s10, 1
        %s126 = sand.u32 %s37, 1
        %s127 = scalar_lea.sflag [#allocation3], %s126
        %s128 = sand.u32 %s37, 1
        %s129 = smul.addr %s128, 32
        %s130 = scalar_lea.vmem [#allocation2], %s129
        // Predicated region
        $region25: #{tpu_custom_call.1} parent=23 // pred_check
          %p131 = pneg %p50
        $region26: #{tpu_custom_call.1} parent=23 // pred_check_branch
          %133 = sbr.rel (%p131) target = $region28
        $region27: #{tpu_custom_call.1} parent=23 // pred_region
          %134 = dma.done %s127, 512
        $region28: #{tpu_custom_call.1} parent=23 // pred_fallthru
          _
        %s135 = sand.u32 %s37, 1
        %s136 = scalar_lea.sflag [#allocation3], %s135
        %s137 = sand.u32 %s37, 1
        %s138 = smul.addr %s137, 32
        %s139 = scalar_lea.vmem [#allocation2], %s138
        %p140 = pneg %p50
        %p141 = pneg %p47
        %p142 = pneg %p78
        %p143 = pneg %p75
        %p144 = scmp.lt.s32.totalorder %s19, 1
        %s145 = scalar_select %p144, %s19, 1
        %p146 = scmp.lt.s32.totalorder %s20, 1
        %s147 = scalar_select %p146, %s20, 1
        %s148 = smul.addr %s147, 8
        %s149 = smul.addr %s145, 16
        %s150 = sadd.s32 %s148, %s149
        %s151 = smul.addr %s150, 8
        %s152 = scalar_lea.vmem %s1, %s151
        %p153 = scmp.lt.s32.totalorder %s19, 1
        %s154 = scalar_select %p153, %s19, 1
        %p155 = scmp.lt.s32.totalorder %s20, 1
        %s156 = scalar_select %p155, %s20, 1
        %s157 = smul.addr %s156, 8
        %s158 = smul.addr %s154, 16
        %s159 = sadd.s32 %s157, %s158
        %s160 = smul.addr %s159, 8
        %s161 = scalar_lea.vmem %s1, %s160
        %v162 = vld [vmem:[%s130] sm:$0xff]
        %v163 = vld [vmem:[%s130 + $0x8] sm:$0xff]
        %v164 = vld [vmem:[%s130 + $0x10] sm:$0xff]
        %v165 = vld [vmem:[%s130 + $0x18] sm:$0xff]
        %166 = vxpose.xlu0.b32.start [1/16] %v162, 128
        %167 = vxpose.xlu0.b32.cont [2/16] %v163, 128
        %168 = vxpose.xlu0.b32.cont [3/16] %v164, 128
        %169 = vxpose.xlu0.b32.cont [4/16] %v165, 128
        %170 = vxpose.xlu0.b32.cont [5/16] 0.0, 128
        %171 = vxpose.xlu0.b32.cont [6/16] 0.0, 128
        %172 = vxpose.xlu0.b32.cont [7/16] 0.0, 128
        %173 = vxpose.xlu0.b32.cont [8/16] 0.0, 128
        %174 = vxpose.xlu0.b32.cont [9/16] 0.0, 128
        %175 = vxpose.xlu0.b32.cont [10/16] 0.0, 128
        %176 = vxpose.xlu0.b32.cont [11/16] 0.0, 128
        %177 = vxpose.xlu0.b32.cont [12/16] 0.0, 128
        %178 = vxpose.xlu0.b32.cont [13/16] 0.0, 128
        %179 = vxpose.xlu0.b32.cont [14/16] 0.0, 128
        %180 = vxpose.xlu0.b32.cont [15/16] 0.0, 128
        %181 = vxpose.xlu0.b32.end [16/16] 0.0, 128
        %v182 = vpop.trf.xlu0
        %v183 = vpop.trf.xlu0
        %v184 = vpop.trf.xlu0
        %v185 = vpop.trf.xlu0
        %v186 = vpop.trf.xlu0
        %v187 = vpop.trf.xlu0
        %v188 = vpop.trf.xlu0
        %v189 = vpop.trf.xlu0
        %v190 = vpop.trf.xlu0
        %v191 = vpop.trf.xlu0
        %v192 = vpop.trf.xlu0
        %v193 = vpop.trf.xlu0
        %v194 = vpop.trf.xlu0
        %v195 = vpop.trf.xlu0
        %v196 = vpop.trf.xlu0
        %v197 = vpop.trf.xlu0
        %198 = vxpose.xlu0.b32.start [1/16] %v182, 128
        %199 = vxpose.xlu0.b32.cont [2/16] 0.0, 128
        %200 = vxpose.xlu0.b32.cont [3/16] 0.0, 128
        %201 = vxpose.xlu0.b32.cont [4/16] 0.0, 128
        %202 = vxpose.xlu0.b32.cont [5/16] 0.0, 128
        %203 = vxpose.xlu0.b32.cont [6/16] 0.0, 128
        %204 = vxpose.xlu0.b32.cont [7/16] 0.0, 128
        %205 = vxpose.xlu0.b32.cont [8/16] 0.0, 128
        %206 = vxpose.xlu0.b32.cont [9/16] 0.0, 128
        %207 = vxpose.xlu0.b32.cont [10/16] 0.0, 128
        %208 = vxpose.xlu0.b32.cont [11/16] 0.0, 128
        %209 = vxpose.xlu0.b32.cont [12/16] 0.0, 128
        %210 = vxpose.xlu0.b32.cont [13/16] 0.0, 128
        %211 = vxpose.xlu0.b32.cont [14/16] 0.0, 128
        %212 = vxpose.xlu0.b32.cont [15/16] 0.0, 128
        %213 = vxpose.xlu0.b32.end [16/16] 0.0, 128
        %v214 = vpop.trf.xlu0
        %v215 = vpop.trf.xlu0
        %v216 = vpop.trf.xlu0
        %v217 = vpop.trf.xlu0
        %v218 = vpop.trf.xlu0
        %v219 = vpop.trf.xlu0
        %v220 = vpop.trf.xlu0
        %v221 = vpop.trf.xlu0
        %v222 = vpop.trf.xlu0
        %v223 = vpop.trf.xlu0
        %v224 = vpop.trf.xlu0
        %v225 = vpop.trf.xlu0
        %v226 = vpop.trf.xlu0
        %v227 = vpop.trf.xlu0
        %v228 = vpop.trf.xlu0
        %v229 = vpop.trf.xlu0
        %230 = vxpose.xlu0.b32.start [1/16] %v183, 128
        %231 = vxpose.xlu0.b32.cont [2/16] 0.0, 128
        %232 = vxpose.xlu0.b32.cont [3/16] 0.0, 128
        %233 = vxpose.xlu0.b32.cont [4/16] 0.0, 128
        %234 = vxpose.xlu0.b32.cont [5/16] 0.0, 128
        %235 = vxpose.xlu0.b32.cont [6/16] 0.0, 128
        %236 = vxpose.xlu0.b32.cont [7/16] 0.0, 128
        %237 = vxpose.xlu0.b32.cont [8/16] 0.0, 128
        %238 = vxpose.xlu0.b32.cont [9/16] 0.0, 128
        %239 = vxpose.xlu0.b32.cont [10/16] 0.0, 128
        %240 = vxpose.xlu0.b32.cont [11/16] 0.0, 128
        %241 = vxpose.xlu0.b32.cont [12/16] 0.0, 128
        %242 = vxpose.xlu0.b32.cont [13/16] 0.0, 128
        %243 = vxpose.xlu0.b32.cont [14/16] 0.0, 128
        %244 = vxpose.xlu0.b32.cont [15/16] 0.0, 128
        %245 = vxpose.xlu0.b32.end [16/16] 0.0, 128
        %v246 = vpop.trf.xlu0
        %v247 = vpop.trf.xlu0
        %v248 = vpop.trf.xlu0
        %v249 = vpop.trf.xlu0
        %v250 = vpop.trf.xlu0
        %v251 = vpop.trf.xlu0
        %v252 = vpop.trf.xlu0
        %v253 = vpop.trf.xlu0
        %v254 = vpop.trf.xlu0
        %v255 = vpop.trf.xlu0
        %v256 = vpop.trf.xlu0
        %v257 = vpop.trf.xlu0
        %v258 = vpop.trf.xlu0
        %v259 = vpop.trf.xlu0
        %v260 = vpop.trf.xlu0
        %v261 = vpop.trf.xlu0
        %vm262 = vcmask 64512
        %263 = vst.msk [vmem:[%s161] sm:$0xff] %vm262, %v214
        %264 = vst.msk [vmem:[%s161 + $0x8] sm:$0xff] %vm262, %v215
        %265 = vst.msk [vmem:[%s161 + $0x10] sm:$0xff] %vm262, %v216
        %266 = vst.msk [vmem:[%s161 + $0x18] sm:$0xff] %vm262, %v217
        %267 = vst.msk [vmem:[%s161 + $0x20] sm:$0xff] %vm262, %v246
        %268 = vst.msk [vmem:[%s161 + $0x28] sm:$0xff] %vm262, %v247
        %269 = vst.msk [vmem:[%s161 + $0x30] sm:$0xff] %vm262, %v248
        %270 = vst.msk [vmem:[%s161 + $0x38] sm:$0xff] %vm262, %v249
        %p271 = scmp.lt.s32.totalorder %s19, 1
        %s272 = scalar_select %p271, %s19, 1
        %p273 = scmp.lt.s32.totalorder %s20, 1
        %s274 = scalar_select %p273, %s20, 1
        %s275 = smul.addr %s274, 8
        %s276 = smul.addr %s272, 16
        %s277 = sadd.s32 %s275, %s276
        %s278 = smul.addr %s277, 8
        %s279 = scalar_lea.vmem %s1, %s278
        // Predicated region
        $region29: #{tpu_custom_call.1} parent=23 // pred_check
          %p280 = pneg %p75
        $region30: #{tpu_custom_call.1} parent=23 // pred_check_branch
          %282 = sbr.rel (%p280) target = $region32
        $region31: #{tpu_custom_call.1} parent=23 // pred_region
          _
        $region32: #{tpu_custom_call.1} parent=23 // pred_fallthru
          _
      $region24: #{tpu_custom_call.1} parent=5 // pred_fallthru
        _
      %p283 = scmp.le.s32.totalorder 2, %s10
      // Predicated region
      $region33: #{tpu_custom_call.1} parent=5 // pred_check
        %p284 = pneg %p283
      $region34: #{tpu_custom_call.1} parent=5 // pred_check_branch
        %286 = sbr.rel (%p284) target = $region36
      $region35: #{tpu_custom_call.1} parent=5 // pred_region
        %s287 = ssub.s32 %s10, 2
        // Predicated region
        $region37: #{tpu_custom_call.1} parent=35 // pred_check
          %p288 = pneg %p81
        $region38: #{tpu_custom_call.1} parent=35 // pred_check_branch
          %290 = sbr.rel (%p288) target = $region40
        $region39: #{tpu_custom_call.1} parent=35 // pred_region
          %p291 = scmp.lt.s32.totalorder %s21, 1
          %s292 = scalar_select %p291, %s21, 1
          %p293 = scmp.lt.s32.totalorder %s22, 1
          %s294 = scalar_select %p293, %s22, 1
          %s295 = smul.addr %s294, 8
          %s296 = smul.addr %s292, 16
          %s297 = sadd.s32 %s295, %s296
          %s298 = smul.addr %s297, 8
          %s299 = scalar_lea.vmem %s1, %s298
        $region40: #{tpu_custom_call.1} parent=35 // pred_fallthru
          _
      $region36: #{tpu_custom_call.1} parent=5 // pred_fallthru
        _
    $region6: #{tpu_custom_call.1} parent=1 // loop_footer
      %s14 = sadd.s32 1, %s10
    $region7: #{tpu_custom_call.1} parent=1 // loop_footer_branch
      %9 = sbr.rel target = $region3
    $region8: #{tpu_custom_call.1} parent=1 // loop_exit
      _
    %300 = vsyncpa [#allocation3], 1
    %s301 = scalar_lea.sflag [#allocation3], 1
    %302 = vsyncpa %s301, 1

</llo_original>
